<compile_context>
chip_gen: v7x
topology: tpu7x:2x2x1
jax: 0.10.0
libtpu: 0.0.40
codegen_flags: <defaults>
</compile_context>

<pallas_src>
import functools

import jax
import jax.numpy as jnp
from jax.experimental import pallas as pl
from jax.experimental.pallas import tpu as pltpu


def _round_up(x, m):
    return ((x + m - 1) // m) * m


def _cdiv(a, b):
    return (a + b - 1) // b


def _sublane_granule(*dtypes):
    # 8 rows/vreg-sublane-group for 32-bit, 16 for bf16, 32 for int8/fp8.
    g = 8
    for dt in dtypes:
        g = max(g, 32 // jnp.dtype(dt).itemsize)
    return g


@functools.lru_cache(maxsize=1)
def _vmem_budget():
    """(per-step working-set budget, vmem_limit_bytes) by TPU generation."""
    try:
        vmem = pltpu.get_tpu_info().vmem_capacity_bytes
    except Exception:
        vmem = 64 * 1024 * 1024            # conservative if the query fails
    if vmem <= 64 * 1024 * 1024:           # v7x-class: 64 MiB physical VMEM
        return 16 * 1024 * 1024, 48 * 1024 * 1024
    # v5e / v6e: 128 MiB physical VMEM -> bigger tiles, amortize grid-step cost
    return 44 * 1024 * 1024, 64 * 1024 * 1024


def _balanced_tile(total, cap, granule):
    """Largest granule-aligned tile <= cap minimizing pad waste: (tile, n_tiles)."""
    total_g = _round_up(max(total, 1), granule)
    cap = max(granule, (cap // granule) * granule)
    nt = _cdiv(total_g, cap)
    tile = _round_up(_cdiv(total_g, nt), granule)
    return tile, nt


# --------------------------- kernels ---------------------------------------


def _conv1d_relu_kernel(x_ref, w_ref, b_ref, o_ref, *, K, TL):
    # x_ref: (L_tot, Cin)  full padded sequence of one batch element (VMEM resident)
    # w_ref: (K, Cin, TN)  weights in im2col order
    # b_ref: (1, TN)       bias (f32)
    # o_ref: (TL, TN)      output rows [l0, l0+TL) of this batch element
    l0 = pl.multiple_of(pl.program_id(2) * TL, TL)
    acc = jnp.dot(x_ref[pl.ds(l0, TL), :], w_ref[0],
                  preferred_element_type=jnp.float32)
    # K is small & static (3/5/7) -> unrolled shifted MXU matmuls, f32 accumulate.
    for k in range(1, K):
        acc += jnp.dot(x_ref[pl.ds(l0 + k, TL), :], w_ref[k],
                       preferred_element_type=jnp.float32)
    acc = acc + b_ref[...]                       # (1, TN) broadcasts over TL
    o_ref[...] = jnp.maximum(acc, 0.0).astype(o_ref.dtype)


def _im2col_matmul_kernel(x_ref, w_ref, b_ref, o_ref):
    # x_ref: (TM, KC) im2col rows; w_ref: (KC, TN); b_ref: (1, TN); o_ref: (TM, TN)
    acc = jnp.dot(x_ref[...], w_ref[...], preferred_element_type=jnp.float32)
    acc = acc + b_ref[...]
    o_ref[...] = jnp.maximum(acc, 0.0).astype(o_ref.dtype)


# --------------------------- wrapper ----------------------------------------


@functools.partial(
    jax.jit,
    static_argnames=("stride", "padding", "compute_dtype", "force_im2col"))
def conv1d_relu(x_ncl, weight, bias, *, stride=1, padding=0,
                compute_dtype=jnp.float32, force_im2col=False):
    """x_ncl: (B, Cin, L) as in PyTorch.  weight: (Cout, Cin, K).  bias: (Cout,)."""
    assert stride == 1, "only stride=1 is implemented (matches module usage)"
    B, Cin, L = x_ncl.shape
    Cout, _, K = weight.shape
    L_out = L + 2 * padding - K + 1
    out_dtype = x_ncl.dtype

    budget, vmem_limit = _vmem_budget()
    itemsize = jnp.dtype(compute_dtype).itemsize
    out_itemsize = jnp.dtype(out_dtype).itemsize
    granule = _sublane_granule(compute_dtype, out_dtype)

    # Cast BEFORE padding / layout so the bf16 path moves bf16 HBM bytes.
    x_nlc = jnp.transpose(x_ncl, (0, 2, 1)).astype(compute_dtype)     # (B, L, Cin)
    x_pad = jnp.pad(x_nlc, ((0, 0), (padding, padding), (0, 0)))      # (B, L+2P, Cin)

    # Only the OUTPUT channel dim is padded to 128 (lane-dense unmasked stores).
    Cout_pad = _round_up(Cout, 128)
    if Cout_pad <= 1024:
        TN = Cout_pad          # single n tile: weights stay VMEM-resident per sweep
    elif Cout_pad % 512 == 0:
        TN = 512
    elif Cout_pad % 256 == 0:
        TN = 256
    else:
        TN = 128
    n_tiles = Cout_pad // TN

    # weights -> (K, Cin, Cout_pad) im2col order; bias -> (1, Cout_pad) f32.
    w_kio = jnp.transpose(weight, (2, 1, 0))                          # (K, Cin, Cout)
    w_kio = jnp.pad(w_kio,
                    ((0, 0), (0, 0), (0, Cout_pad - Cout))).astype(compute_dtype)
    b_row = jnp.pad(bias, (0, Cout_pad - Cout)).reshape(1, Cout_pad)
    b_row = b_row.astype(jnp.float32)

    # ---------------- primary path: in-kernel im2col -------------------------
    def path_a_working(TL, nt):
        L_tot = nt * TL + K - 1
        x_b = L_tot * Cin * itemsize                  # whole padded sequence block
        w_b = K * Cin * TN * itemsize
        o_b = TL * TN * out_itemsize
        acc_b = TL * TN * 4                           # f32 accumulator temporaries
        return 2 * (x_b + w_b + o_b + TN * 4) + acc_b

    cap = 1024
    TL, nt = _balanced_tile(L_out, cap, granule)
    while TL > granule and path_a_working(TL, nt) > budget:
        cap = max(granule, (cap // 2 // granule) * granule)
        TL, nt = _balanced_tile(L_out, cap, granule)
    # Give both v7x TensorCores work even for tiny grids (B=1, single n tile).
    if B * n_tiles * nt < 2 and _round_up(L_out, granule) >= 2 * granule:
        cap = _round_up(_cdiv(L_out, 2), granule)
        TL, nt = _balanced_tile(L_out, cap, granule)

    use_path_a = (not force_im2col) and path_a_working(TL, nt) <= budget

    if use_path_a:
        L_out_pad = nt * TL
        L_tot = L_out_pad + K - 1
        # Zero-pad so every shifted window of the last length-tile is in bounds.
        x_seq = jnp.pad(x_pad,
                        ((0, 0), (0, L_tot - (L + 2 * padding)), (0, 0)))

        kernel = functools.partial(_conv1d_relu_kernel, K=K, TL=TL)
        out = pl.pallas_call(
            kernel,
            out_shape=jax.ShapeDtypeStruct((B, L_out_pad, Cout_pad), out_dtype),
            grid_spec=pltpu.PrefetchScalarGridSpec(
                num_scalar_prefetch=0,
                # l innermost: x is DMA'd once per batch element, weights once
                # per (b, n); only the output tile streams every step.
                grid=(B, n_tiles, nt),
                in_specs=[
                    pl.BlockSpec((None, L_tot, Cin), lambda b, n, l: (b, 0, 0)),
                    pl.BlockSpec((K, Cin, TN), lambda b, n, l: (0, 0, n)),
                    pl.BlockSpec((1, TN), lambda b, n, l: (0, n)),
                ],
                out_specs=pl.BlockSpec((None, TL, TN), lambda b, n, l: (b, l, n)),
            ),
            compiler_params=pltpu.CompilerParams(
                dimension_semantics=("parallel", "parallel", "parallel"),
                vmem_limit_bytes=vmem_limit,
            ),
        )(x_seq, w_kio, b_row)

        out_nlc = out[:, :L_out, :Cout]                      # strip padding
        return jnp.transpose(out_nlc, (0, 2, 1))             # back to (B, Cout, L_out)

    # ---------------- fallback: wrapper-side im2col, one matmul per tile -----
    # Only taken when a whole padded per-batch sequence block does not fit the
    # per-step VMEM budget (very long sequences x wide channels).
    # TODO(synk): for huge K*Cin a k-split ("arbitrary") grid axis with an f32
    # accumulator scratch would keep TM large; not needed for this module's shapes.
    x_col = jnp.concatenate([x_pad[:, k:k + L_out, :] for k in range(K)],
                            axis=-1)                          # (B, L_out, K*Cin)
    KC = K * Cin
    M = B * L_out
    x2d = x_col.reshape(M, KC)                                # natural KC, no 128 pad
    w2d = w_kio.reshape(KC, Cout_pad)                         # rows ordered k*Cin+ci

    def path_b_working(TM):
        return (2 * itemsize * (TM * KC + KC * TN)
                + 2 * (out_itemsize * TM * TN + 4 * TN)
                + 4 * TM * TN)

    cap = 1024
    TM, mt = _balanced_tile(M, cap, granule)
    while TM > granule and path_b_working(TM) > budget:
        cap = max(granule, (cap // 2 // granule) * granule)
        TM, mt = _balanced_tile(M, cap, granule)
    if mt * n_tiles < 2 and _round_up(M, granule) >= 2 * granule:
        cap = _round_up(_cdiv(M, 2), granule)
        TM, mt = _balanced_tile(M, cap, granule)

    M_pad = mt * TM                      # waste bounded by ~mt*granule rows
    x2d = jnp.pad(x2d, ((0, M_pad - M), (0, 0)))

    # Note: on 128 MiB-VMEM parts (v5e/v6e), pipeline_mode=pl.Buffered(3) on the
    # x spec can hide DMA latency when KC is tiny; left at the default depth here.
    out2d = pl.pallas_call(
        _im2col_matmul_kernel,
        out_shape=jax.ShapeDtypeStruct((M_pad, Cout_pad), out_dtype),
        grid_spec=pltpu.PrefetchScalarGridSpec(
            num_scalar_prefetch=0,
            grid=(mt, n_tiles),
            in_specs=[
                pl.BlockSpec((TM, KC), lambda m, n: (m, 0)),
                pl.BlockSpec((KC, TN), lambda m, n: (0, n)),
                pl.BlockSpec((1, TN), lambda m, n: (0, n)),
            ],
            out_specs=pl.BlockSpec((TM, TN), lambda m, n: (m, n)),
        ),
        compiler_params=pltpu.CompilerParams(
            dimension_semantics=("parallel", "parallel"),
            vmem_limit_bytes=vmem_limit,
        ),
    )(x2d, w2d, b_row)

    out_nlc = out2d[:M, :Cout].reshape(B, L_out, Cout)
    return jnp.transpose(out_nlc, (0, 2, 1))                  # (B, Cout, L_out)


# --------------------------- reference & test --------------------------------


def _reference(x_ncl, weight, bias, padding, quant_dtype=None):
    """Pure-jnp reference of Conv1d(stride=1) + ReLU for validation."""
    B, Cin, L = x_ncl.shape
    Cout, _, K = weight.shape
    x_nlc = jnp.transpose(x_ncl, (0, 2, 1))
    x_pad = jnp.pad(x_nlc, ((0, 0), (padding, padding), (0, 0)))
    L_out = L + 2 * padding - K + 1
    w_kio = jnp.transpose(weight, (2, 1, 0))
    if quant_dtype is not None:   # emulate low-precision MXU input rounding
        x_pad = x_pad.astype(quant_dtype).astype(jnp.float32)
        w_kio = w_kio.astype(quant_dtype).astype(jnp.float32)
    acc = jnp.zeros((B, L_out, Cout), jnp.float32)
    for k in range(K):
        acc = acc + jnp.einsum("bli,io->blo", x_pad[:, k:k + L_out, :], w_kio[k])
    acc = acc + bias[None, None, :]
    return jnp.transpose(jnp.maximum(acc, 0.0), (0, 2, 1)).astype(x_ncl.dtype)


if __name__ == "__main__":
    key = jax.random.PRNGKey(0)

    def make_case(k, B, Cin, Cout, L, K):
        kx, kw, kb = jax.random.split(k, 3)
        x = jax.random.normal(kx, (B, Cin, L), dtype=jnp.float32)
        bound = 1.0 / (Cin * K) ** 0.5     # PyTorch-style uniform init
        w = jax.random.uniform(kw, (Cout, Cin, K), jnp.float32, -bound, bound)
        b = jax.random.uniform(kb, (Cout,), jnp.float32, -bound, bound)
        return x, w, b

    k1, k2, k3 = jax.random.split(key, 3)

    # Variant 1: kernel_size=3, padding=1 — f32 exact + bf16 MXU paths.
    x, w, b = make_case(k1, 2, 4, 8, 16, 3)
    out = conv1d_relu(x, w, b, stride=1, padding=1)
    jax.block_until_ready(out)
    ref = _reference(x, w, b, 1)
    assert out.shape == (2, 8, 16)
    assert jnp.allclose(out, ref, atol=1e-5, rtol=1e-5), "f32 K=3 mismatch"

    out_bf16 = conv1d_relu(x, w, b, stride=1, padding=1,
                           compute_dtype=jnp.bfloat16)
    jax.block_until_ready(out_bf16)
    ref_bf16 = _reference(x, w, b, 1, quant_dtype=jnp.bfloat16)
    assert jnp.allclose(out_bf16, ref_bf16, atol=1e-2, rtol=1e-2), "bf16 mismatch"

    # Variant 2: kernel_size=5, padding=2 — B=1, odd length (exercises granule
    # padding and the 2-TensorCore length split).
    x, w, b = make_case(k2, 1, 6, 10, 21, 5)
    out = conv1d_relu(x, w, b, stride=1, padding=2)
    jax.block_until_ready(out)
    assert jnp.allclose(out, _reference(x, w, b, 2), atol=1e-5, rtol=1e-5), \
        "K=5 mismatch"

    # Variant 3: kernel_size=7, padding=3.
    x, w, b = make_case(k3, 2, 4, 8, 16, 7)
    out = conv1d_relu(x, w, b, stride=1, padding=3)
    jax.block_until_ready(out)
    assert jnp.allclose(out, _reference(x, w, b, 3), atol=1e-5, rtol=1e-5), \
        "K=7 mismatch"

    # Fallback (wrapper-side im2col) path, forced for coverage.
    x, w, b = make_case(k1, 2, 4, 8, 16, 3)
    out_fb = conv1d_relu(x, w, b, stride=1, padding=1, force_im2col=True)
    jax.block_until_ready(out_fb)
    assert jnp.allclose(out_fb, _reference(x, w, b, 1), atol=1e-5, rtol=1e-5), \
        "im2col fallback mismatch"

    print("KERNEL_OK")
</pallas_src>

<mosaic_0001>
module attributes {stable_mosaic.version = 11 : i64} {
  func.func @_conv1d_relu_kernel(%arg0: i32, %arg1: i32, %arg2: i32, %arg3: memref<1x18x4xf32, #tpu.memory_space<vmem>>, %arg4: memref<3x4x128xf32, #tpu.memory_space<vmem>>, %arg5: memref<1x128xf32, #tpu.memory_space<vmem>>, %arg6: memref<1x16x128xf32, #tpu.memory_space<vmem>>) attributes {dimension_semantics = [#tpu.dimension_semantics<parallel>, #tpu.dimension_semantics<parallel>, #tpu.dimension_semantics<parallel>], iteration_bounds = array<i64: 2, 1, 1>, scalar_prefetch = 0 : i64, scratch_operands = 0 : i64, tpu.core_type = #tpu.core_type<tc>, window_params = [{transform_indices = @transform_0, window_bounds = array<i64: 1, 18, 4>}, {transform_indices = @transform_1, window_bounds = array<i64: 3, 4, 128>}, {transform_indices = @transform_2, window_bounds = array<i64: 1, 128>}, {transform_indices = @transform_3, window_bounds = array<i64: 1, 16, 128>}]} {
    %c16_i32 = arith.constant 16 : i32
    %0 = arith.muli %arg2, %c16_i32 : i32
    %1 = tpu.assume_multiple %0, 16 : i32
    %c0 = arith.constant 0 : index
    %2 = arith.index_cast %1 : i32 to index
    %c0_0 = arith.constant 0 : index
    %3 = vector.load %arg3[%c0, %2, %c0_0] : memref<1x18x4xf32, #tpu.memory_space<vmem>>, vector<1x16x4xf32>
    %4 = vector.shape_cast %3 : vector<1x16x4xf32> to vector<16x4xf32>
    %c0_1 = arith.constant 0 : index
    %c0_2 = arith.constant 0 : index
    %c0_3 = arith.constant 0 : index
    %5 = vector.load %arg4[%c0_1, %c0_2, %c0_3] : memref<3x4x128xf32, #tpu.memory_space<vmem>>, vector<1x4x128xf32>
    %6 = vector.shape_cast %5 : vector<1x4x128xf32> to vector<4x128xf32>
    %cst = arith.constant dense<0.000000e+00> : vector<16x128xf32>
    %7 = tpu.matmul %4, %6, %cst {dimension_numbers = #tpu.dot_dimension_numbers<[1], [0], [0], [1], [0, 0, 1, 1], [], []>} : vector<16x4xf32>, vector<4x128xf32>, vector<16x128xf32> -> vector<16x128xf32>
    %c1_i32 = arith.constant 1 : i32
    %8 = arith.addi %1, %c1_i32 : i32
    %c0_4 = arith.constant 0 : index
    %9 = arith.index_cast %8 : i32 to index
    %c0_5 = arith.constant 0 : index
    %10 = vector.load %arg3[%c0_4, %9, %c0_5] : memref<1x18x4xf32, #tpu.memory_space<vmem>>, vector<1x16x4xf32>
    %11 = vector.shape_cast %10 : vector<1x16x4xf32> to vector<16x4xf32>
    %c1 = arith.constant 1 : index
    %c0_6 = arith.constant 0 : index
    %c0_7 = arith.constant 0 : index
    %12 = vector.load %arg4[%c1, %c0_6, %c0_7] : memref<3x4x128xf32, #tpu.memory_space<vmem>>, vector<1x4x128xf32>
    %13 = vector.shape_cast %12 : vector<1x4x128xf32> to vector<4x128xf32>
    %cst_8 = arith.constant dense<0.000000e+00> : vector<16x128xf32>
    %14 = tpu.matmul %11, %13, %cst_8 {dimension_numbers = #tpu.dot_dimension_numbers<[1], [0], [0], [1], [0, 0, 1, 1], [], []>} : vector<16x4xf32>, vector<4x128xf32>, vector<16x128xf32> -> vector<16x128xf32>
    %15 = arith.addf %7, %14 : vector<16x128xf32>
    %c2_i32 = arith.constant 2 : i32
    %16 = arith.addi %1, %c2_i32 : i32
    %c0_9 = arith.constant 0 : index
    %17 = arith.index_cast %16 : i32 to index
    %c0_10 = arith.constant 0 : index
    %18 = vector.load %arg3[%c0_9, %17, %c0_10] : memref<1x18x4xf32, #tpu.memory_space<vmem>>, vector<1x16x4xf32>
    %19 = vector.shape_cast %18 : vector<1x16x4xf32> to vector<16x4xf32>
    %c2 = arith.constant 2 : index
    %c0_11 = arith.constant 0 : index
    %c0_12 = arith.constant 0 : index
    %20 = vector.load %arg4[%c2, %c0_11, %c0_12] : memref<3x4x128xf32, #tpu.memory_space<vmem>>, vector<1x4x128xf32>
    %21 = vector.shape_cast %20 : vector<1x4x128xf32> to vector<4x128xf32>
    %cst_13 = arith.constant dense<0.000000e+00> : vector<16x128xf32>
    %22 = tpu.matmul %19, %21, %cst_13 {dimension_numbers = #tpu.dot_dimension_numbers<[1], [0], [0], [1], [0, 0, 1, 1], [], []>} : vector<16x4xf32>, vector<4x128xf32>, vector<16x128xf32> -> vector<16x128xf32>
    %23 = arith.addf %15, %22 : vector<16x128xf32>
    %c0_14 = arith.constant 0 : index
    %c0_15 = arith.constant 0 : index
    %24 = vector.load %arg5[%c0_14, %c0_15] : memref<1x128xf32, #tpu.memory_space<vmem>>, vector<1x128xf32>
    %25 = vector.broadcast %24 : vector<1x128xf32> to vector<16x128xf32>
    %26 = arith.addf %23, %25 : vector<16x128xf32>
    %cst_16 = arith.constant 0.000000e+00 : f32
    %27 = vector.broadcast %cst_16 : f32 to vector<16x128xf32>
    %28 = arith.maximumf %26, %27 : vector<16x128xf32>
    %c0_17 = arith.constant 0 : index
    %c0_18 = arith.constant 0 : index
    %c0_19 = arith.constant 0 : index
    %29 = vector.load %arg6[%c0_17, %c0_18, %c0_19] : memref<1x16x128xf32, #tpu.memory_space<vmem>>, vector<1x16x128xf32>
    %30 = vector.shape_cast %29 : vector<1x16x128xf32> to vector<16x128xf32>
    %31 = vector.shape_cast %28 : vector<16x128xf32> to vector<1x16x128xf32>
    tpu.vector_store %arg6[%c0_17, %c0_18, %c0_19], %31 {strides = array<i32>} : memref<1x16x128xf32, #tpu.memory_space<vmem>>, vector<1x16x128xf32>,
    return
  }
  func.func @transform_0(%arg0: i32, %arg1: i32, %arg2: i32) -> (i32, i32, i32) {
    %c0_i32 = arith.constant 0 : i32
    %c0_i32_0 = arith.constant 0 : i32
    %c0_i32_1 = arith.constant 0 : i32
    return %arg0, %c0_i32, %c0_i32_0 : i32, i32, i32
  }
  func.func @transform_1(%arg0: i32, %arg1: i32, %arg2: i32) -> (i32, i32, i32) {
    %c0_i32 = arith.constant 0 : i32
    %c0_i32_0 = arith.constant 0 : i32
    %c0_i32_1 = arith.constant 0 : i32
    return %c0_i32, %c0_i32_0, %arg1 : i32, i32, i32
  }
  func.func @transform_2(%arg0: i32, %arg1: i32, %arg2: i32) -> (i32, i32) {
    %c0_i32 = arith.constant 0 : i32
    %c0_i32_0 = arith.constant 0 : i32
    return %c0_i32, %arg1 : i32, i32
  }
  func.func @transform_3(%arg0: i32, %arg1: i32, %arg2: i32) -> (i32, i32, i32) {
    %c0_i32 = arith.constant 0 : i32
    return %arg0, %arg2, %arg1 : i32, i32, i32
  }
}

</mosaic_0001>

<llo_original>
// kernel: conv1d_relu.1
$region0: #{conv1d_relu.1}
  #allocation0 [shape = 'u32[]', space=smem, size = 0x4, offset = 0x4, fixed_abs, tag = 'smem constant byte address 0x4 - core index']
  #allocation1 [shape = 'u32[144,128]{1,0:T(1,128)}', space=vmem, size = 0x12000, scoped, tag = 'internal scratch']
  %s0 = inlined_call_operand.vmem [shape: f32[2,18,4], index: 0, kind: input, shape index: {}]
  %s1 = inlined_call_operand.vmem [shape: f32[3,4,128], index: 1, kind: input, shape index: {}]
  %s2 = inlined_call_operand.vmem [shape: f32[1,128], index: 2, kind: input, shape index: {}]
  %s3 = inlined_call_operand.vmem [shape: f32[2,16,128], index: 3, kind: output, shape index: {}]
  %s4 = sld [smem:[#allocation0]]
  $region45: #{conv1d_relu.1} parent=0
    _
  %s6 = ssub.s32 1, %s4
  %s7 = scalar_select 0, %s6, %s4
  loop: start=0, step=1, limit=4
  $region2: #{conv1d_relu.1} parent=0 // loop_pre_header
    _
  $region3: #{conv1d_relu.1} parent=0 // loop_header
    %s9 = sphi 0, %s13
    %p10 = scmp.ge.s32.totalorder %s9, 4
    %s16 = sphi 0, %s35
    %s17 = sphi 0, %s31
    %s18 = sphi 0, %s27
    %s19 = sphi 0, %s16
    %s20 = sphi 0, %s17
    %s21 = sphi 0, %s18
    %s22 = sphi 0, %s19
    %s23 = sphi 0, %s20
    %s24 = sphi 0, %s21
    %s38 = sphi 0, %s40
    %s41 = sphi 0, %s38
    %s42 = sphi 0, %s41
    %s58 = sphi 0, %s42
    %s64 = sphi 0, %s66
    %s67 = sphi 0, %s64
    %s68 = sphi 0, %s67
    %s84 = sphi 0, %s68
    %s90 = sphi 0, %s92
    %s93 = sphi 0, %s90
    %s94 = sphi 0, %s93
    %s110 = sphi 0, %s94
    %s120 = sphi 0, %s122
    %s123 = sphi 0, %s120
    %s124 = sphi 0, %s123
    %s140 = sphi 0, %s124
  $region4: #{conv1d_relu.1} parent=0 // loop_header_branch
    %12 = sbr.rel (%p10) target = $region8
  $region5: #{conv1d_relu.1} parent=0 // loop_body
    %s14 = ssub.s32 %s9, 1
    %s15 = ssub.s32 %s9, 2
    %s25 = sadd.s32 1, %s18
    %p26 = scmp.ge.s32.totalorder %s25, 1
    %s27 = scalar_select %p26, 0, %s25
    %s28 = sadd.s32 1, %s17
    %s29 = scalar_select %p26, %s28, %s17
    %p30 = scmp.ge.s32.totalorder %s29, 1
    %s31 = scalar_select %p30, 0, %s29
    %s32 = sadd.s32 1, %s16
    %s33 = scalar_select %p30, %s32, %s16
    %p34 = scmp.ge.s32.totalorder %s33, 2
    %s35 = scalar_select %p34, 0, %s33
    %s36 = ssub.s32 %s16, %s35
    %p37 = scmp.eq.s32.totalorder %s36, 0
    %s39 = sadd.s32 %s38, 1
    %s40 = scalar_select %p37, %s38, %s39
    %p43 = pneg %p37
    %p44 = scmp.eq.s32.totalorder %s9, 1
    %p45 = por %p43, %p44
    %p46 = scmp.ne.s32.totalorder %s38, %s41
    %p47 = scmp.eq.s32.totalorder %s9, 0
    %p48 = por %p46, %p47
    %p49 = scmp.ne.s32.totalorder %s38, %s41
    %p50 = scmp.eq.s32.totalorder %s14, 1
    %p51 = por %p49, %p50
    %p52 = scmp.ne.s32.totalorder %s41, %s42
    %p53 = scmp.eq.s32.totalorder %s14, 0
    %p54 = por %p52, %p53
    %p55 = scmp.ne.s32.totalorder %s41, %s42
    %p56 = scmp.eq.s32.totalorder %s15, 1
    %p57 = por %p55, %p56
    %p59 = scmp.ne.s32.totalorder %s42, %s58
    %p60 = scmp.eq.s32.totalorder %s15, 0
    %p61 = por %p59, %p60
    %s62 = ssub.s32 %s17, %s31
    %p63 = scmp.eq.s32.totalorder %s62, 0
    %s65 = sadd.s32 %s64, 1
    %s66 = scalar_select %p63, %s64, %s65
    %p69 = pneg %p63
    %p70 = scmp.eq.s32.totalorder %s9, 1
    %p71 = por %p69, %p70
    %p72 = scmp.ne.s32.totalorder %s64, %s67
    %p73 = scmp.eq.s32.totalorder %s9, 0
    %p74 = por %p72, %p73
    %p75 = scmp.ne.s32.totalorder %s64, %s67
    %p76 = scmp.eq.s32.totalorder %s14, 1
    %p77 = por %p75, %p76
    %p78 = scmp.ne.s32.totalorder %s67, %s68
    %p79 = scmp.eq.s32.totalorder %s14, 0
    %p80 = por %p78, %p79
    %p81 = scmp.ne.s32.totalorder %s67, %s68
    %p82 = scmp.eq.s32.totalorder %s15, 1
    %p83 = por %p81, %p82
    %p85 = scmp.ne.s32.totalorder %s68, %s84
    %p86 = scmp.eq.s32.totalorder %s15, 0
    %p87 = por %p85, %p86
    %s88 = ssub.s32 %s17, %s31
    %p89 = scmp.eq.s32.totalorder %s88, 0
    %s91 = sadd.s32 %s90, 1
    %s92 = scalar_select %p89, %s90, %s91
    %p95 = pneg %p89
    %p96 = scmp.eq.s32.totalorder %s9, 1
    %p97 = por %p95, %p96
    %p98 = scmp.ne.s32.totalorder %s90, %s93
    %p99 = scmp.eq.s32.totalorder %s9, 0
    %p100 = por %p98, %p99
    %p101 = scmp.ne.s32.totalorder %s90, %s93
    %p102 = scmp.eq.s32.totalorder %s14, 1
    %p103 = por %p101, %p102
    %p104 = scmp.ne.s32.totalorder %s93, %s94
    %p105 = scmp.eq.s32.totalorder %s14, 0
    %p106 = por %p104, %p105
    %p107 = scmp.ne.s32.totalorder %s93, %s94
    %p108 = scmp.eq.s32.totalorder %s15, 1
    %p109 = por %p107, %p108
    %p111 = scmp.ne.s32.totalorder %s94, %s110
    %p112 = scmp.eq.s32.totalorder %s15, 0
    %p113 = por %p111, %p112
    %s114 = ssub.s32 %s16, %s35
    %s115 = ssub.s32 %s18, %s27
    %s116 = sor.u32 %s114, %s115
    %s117 = ssub.s32 %s17, %s31
    %s118 = sor.u32 %s116, %s117
    %p119 = scmp.eq.s32.totalorder %s118, 0
    %s121 = sadd.s32 %s120, 1
    %s122 = scalar_select %p119, %s120, %s121
    %p125 = pneg %p119
    %p126 = scmp.eq.s32.totalorder %s9, 1
    %p127 = por %p125, %p126
    %p128 = scmp.ne.s32.totalorder %s120, %s123
    %p129 = scmp.eq.s32.totalorder %s9, 0
    %p130 = por %p128, %p129
    %p131 = scmp.ne.s32.totalorder %s120, %s123
    %p132 = scmp.eq.s32.totalorder %s14, 1
    %p133 = por %p131, %p132
    %p134 = scmp.ne.s32.totalorder %s123, %s124
    %p135 = scmp.eq.s32.totalorder %s14, 0
    %p136 = por %p134, %p135
    %p137 = scmp.ne.s32.totalorder %s123, %s124
    %p138 = scmp.eq.s32.totalorder %s15, 1
    %p139 = por %p137, %p138
    %p141 = scmp.ne.s32.totalorder %s124, %s140
    %p142 = scmp.eq.s32.totalorder %s15, 0
    %p143 = por %p141, %p142
    %p144 = scmp.le.s32.totalorder 1, %s9
    %p145 = scmp.lt.s32.totalorder %s9, 3
    %p146 = pnand %p144, %p145
    %p147 = pneg %p146
    // Predicated region
    $region9: #{conv1d_relu.1} parent=5 // pred_check
      _
    $region10: #{conv1d_relu.1} parent=5 // pred_check_branch
      %149 = sbr.rel (%p146) target = $region12
    $region11: #{conv1d_relu.1} parent=5 // pred_region
      %s150 = ssub.s32 %s9, 1
      // Predicated region
      $region13: #{conv1d_relu.1} parent=11 // pred_check
        %p151 = pneg %p80
      $region14: #{conv1d_relu.1} parent=11 // pred_check_branch
        %153 = sbr.rel (%p151) target = $region16
      $region15: #{conv1d_relu.1} parent=11 // pred_region
        %p154 = scmp.lt.s32.totalorder %s20, 0
        %s155 = scalar_select %p154, %s20, 0
        %s156 = smul.addr %s155, 4
        %s157 = scalar_lea.vmem %s1, %s156
      $region16: #{conv1d_relu.1} parent=11 // pred_fallthru
        _
      // Predicated region
      $region17: #{conv1d_relu.1} parent=11 // pred_check
        %p158 = pneg %p106
      $region18: #{conv1d_relu.1} parent=11 // pred_check_branch
        %160 = sbr.rel (%p158) target = $region20
      $region19: #{conv1d_relu.1} parent=11 // pred_region
        %p161 = scmp.lt.s32.totalorder %s20, 0
        %s162 = scalar_select %p161, %s20, 0
        %s163 = scalar_lea.vmem %s2, %s162
      $region20: #{conv1d_relu.1} parent=11 // pred_fallthru
        _
    $region12: #{conv1d_relu.1} parent=5 // pred_fallthru
      _
    %p164 = scmp.lt.s32.totalorder %s9, 2
    // Predicated region
    $region21: #{conv1d_relu.1} parent=5 // pred_check
      %p165 = pneg %p164
    $region22: #{conv1d_relu.1} parent=5 // pred_check_branch
      %167 = sbr.rel (%p165) target = $region24
    $region23: #{conv1d_relu.1} parent=5 // pred_region
      // Predicated region
      $region25: #{conv1d_relu.1} parent=23 // pred_check
        %p168 = pneg %p48
      $region26: #{conv1d_relu.1} parent=23 // pred_check_branch
        %170 = sbr.rel (%p168) target = $region28
      $region27: #{conv1d_relu.1} parent=23 // pred_region
        %p171 = scmp.lt.s32.totalorder %s16, 1
        %s172 = scalar_select %p171, %s16, 1
        %s173 = smul.addr %s172, 3
        %s174 = smul.addr %s173, 8
        %s175 = scalar_lea.vmem %s0, %s174
      $region28: #{conv1d_relu.1} parent=23 // pred_fallthru
        _
    $region24: #{conv1d_relu.1} parent=5 // pred_fallthru
      _
    %p176 = scmp.le.s32.totalorder 1, %s9
    %p177 = scmp.lt.s32.totalorder %s9, 3
    %p178 = pnand %p176, %p177
    %p179 = pneg %p178
    // Predicated region
    $region29: #{conv1d_relu.1} parent=5 // pred_check
      _
    $region30: #{conv1d_relu.1} parent=5 // pred_check_branch
      %181 = sbr.rel (%p178) target = $region32
    $region31: #{conv1d_relu.1} parent=5 // pred_region
      %s182 = ssub.s32 %s9, 1
      %p183 = scmp.lt.s32.totalorder %s19, 1
      %s184 = scalar_select %p183, %s19, 1
      %s185 = smul.addr %s184, 3
      %s186 = smul.addr %s185, 8
      %s187 = scalar_lea.vmem %s0, %s186
      %p188 = pneg %p54
      %p189 = pneg %p51
      %p190 = scmp.lt.s32.totalorder %s20, 0
      %s191 = scalar_select %p190, %s20, 0
      %s192 = smul.addr %s191, 4
      %s193 = scalar_lea.vmem %s1, %s192
      %p194 = pneg %p80
      %p195 = pneg %p77
      %p196 = scmp.lt.s32.totalorder %s20, 0
      %s197 = scalar_select %p196, %s20, 0
      %s198 = scalar_lea.vmem %s2, %s197
      %p199 = pneg %p106
      %p200 = pneg %p103
      %p201 = pneg %p136
      %p202 = pneg %p133
      %s203 = smul.u32 2, %s21
      %p204 = scmp.lt.s32.totalorder %s19, 1
      %s205 = scalar_select %p204, %s19, 1
      %p206 = scmp.lt.s32.totalorder %s203, 1
      %s207 = scalar_select %p206, %s203, 1
      %p208 = scmp.lt.s32.totalorder %s20, 0
      %s209 = scalar_select %p208, %s20, 0
      %s210 = sadd.s32 %s209, %s207
      %s211 = smul.addr %s205, 2
      %s212 = sadd.s32 %s210, %s211
      %s213 = smul.addr %s212, 8
      %s214 = scalar_lea.vmem %s3, %s213
      %p215 = scmp.lt.s32.totalorder %s19, 1
      %s216 = scalar_select %p215, %s19, 1
      %s217 = smul.addr %s216, 3
      %s218 = smul.addr %s217, 8
      %s219 = scalar_lea.vmem %s0, %s218
      %p220 = scmp.lt.s32.totalorder %s20, 0
      %s221 = scalar_select %p220, %s20, 0
      %s222 = smul.addr %s221, 4
      %s223 = scalar_lea.vmem %s1, %s222
      %p224 = scmp.lt.s32.totalorder %s20, 0
      %s225 = scalar_select %p224, %s20, 0
      %s226 = scalar_lea.vmem %s2, %s225
      %s227 = smul.u32 2, %s21
      %p228 = scmp.lt.s32.totalorder %s19, 1
      %s229 = scalar_select %p228, %s19, 1
      %p230 = scmp.lt.s32.totalorder %s227, 1
      %s231 = scalar_select %p230, %s227, 1
      %p232 = scmp.lt.s32.totalorder %s20, 0
      %s233 = scalar_select %p232, %s20, 0
      %s234 = sadd.s32 %s233, %s231
      %s235 = smul.addr %s229, 2
      %s236 = sadd.s32 %s234, %s235
      %s237 = smul.addr %s236, 8
      %s238 = scalar_lea.vmem %s3, %s237
      %s239 = smul.u32 2, %s21
      %s240 = smul.u32 %s21, 16
      %s241 = scalar_lea.vmem %s219, %s240
      %v242 = vld [vmem:[%s241] sm:$0xff]
      %v243 = vld [vmem:[%s241 + $0x8] sm:$0xff]
      %v244 = vld [vmem:[%s223] sm:$0xf]
      %s245 = sadd.s32 %s240, 1
      %s246 = scalar_lea.vmem %s219, %s245
      %v247 = vld [vmem:[%s246] sm:$0xff]
      %v248 = vld [vmem:[%s246 + $0x8] sm:$0xff]
      %s249 = scalar_lea.vmem %s223, 4
      %v250 = vld [vmem:[%s249] sm:$0xf]
      %vm251 = vcmask 31744
      %v253 = vsel %vm251, %v247, 0
      %v256 = vsel %vm251, %v248, 0
      %vm258 = vcmask 1043456
      %v260 = vsel %vm258, %v250, 0
      %262 = vmatprep.subr.mxu0 0.0
      %263 = vmatpush1.msra.mxu0 %v260
      %264 = vmatprep.subr.mxu0 0.0
      %265 = vmatpush1.msra.mxu0 0.0
      %266 = vmatprep.subr.mxu0 0.0
      %267 = vmatpush1.msra.mxu0 0.0
      %268 = vmatprep.subr.mxu0 0.0
      %269 = vmatpush1.msra.mxu0 0.0
      %270 = vmatprep.subr.mxu0 0.0
      %271 = vmatpush1.msra.mxu0 0.0
      %272 = vmatprep.subr.mxu0 0.0
      %273 = vmatpush1.msra.mxu0 0.0
      %274 = vmatprep.subr.mxu0 0.0
      %275 = vmatpush1.msra.mxu0 0.0
      %276 = vmatprep.subr.mxu0 0.0
      %277 = vmatpush1.msra.mxu0 0.0
      %278 = vmatprep.subr.mxu0 0.0
      %279 = vmatpush1.msra.mxu0 0.0
      %280 = vmatprep.subr.mxu0 0.0
      %281 = vmatpush1.msra.mxu0 0.0
      %282 = vmatprep.subr.mxu0 0.0
      %283 = vmatpush1.msra.mxu0 0.0
      %284 = vmatprep.subr.mxu0 0.0
      %285 = vmatpush1.msra.mxu0 0.0
      %286 = vmatprep.subr.mxu0 0.0
      %287 = vmatpush1.msra.mxu0 0.0
      %288 = vmatprep.subr.mxu0 0.0
      %289 = vmatpush1.msra.mxu0 0.0
      %290 = vmatprep.subr.mxu0 0.0
      %291 = vmatpush1.msra.mxu0 0.0
      %292 = vmatprep.subr.mxu0 0.0
      %293 = vmatpush1.msra.mxu0 0.0
      %294 = vmatprep.subr.mxu0 0.0
      %295 = vmatpush1.msra.mxu0 0.0
      %296 = vmatprep.subr.mxu0 0.0
      %297 = vmatpush1.msra.mxu0 0.0
      %298 = vmatprep.subr.mxu0 0.0
      %299 = vmatpush1.msra.mxu0 0.0
      %300 = vmatprep.subr.mxu0 0.0
      %301 = vmatpush1.msra.mxu0 0.0
      %302 = vmatprep.subr.mxu0 0.0
      %303 = vmatpush1.msra.mxu0 0.0
      %304 = vmatprep.subr.mxu0 0.0
      %305 = vmatpush1.msra.mxu0 0.0
      %306 = vmatprep.subr.mxu0 0.0
      %307 = vmatpush1.msra.mxu0 0.0
      %308 = vmatprep.subr.mxu0 0.0
      %309 = vmatpush1.msra.mxu0 0.0
      %310 = vmatprep.subr.mxu0 0.0
      %311 = vmatpush1.msra.mxu0 0.0
      %312 = vmatprep.subr.mxu0 0.0
      %313 = vmatpush1.msra.mxu0 0.0
      %314 = vmatprep.subr.mxu0 0.0
      %315 = vmatpush1.msra.mxu0 0.0
      %316 = vmatprep.subr.mxu0 0.0
      %317 = vmatpush1.msra.mxu0 0.0
      %318 = vmatprep.subr.mxu0 0.0
      %319 = vmatpush1.msra.mxu0 0.0
      %320 = vmatprep.subr.mxu0 0.0
      %321 = vmatpush1.msra.mxu0 0.0
      %322 = vmatprep.subr.mxu0 0.0
      %323 = vmatpush1.msra.mxu0 0.0
      %324 = vmatprep.subr.mxu0 0.0
      %325 = vmatpush1.msra.mxu0 0.0
      %326 = vmatprep.mubr.f32.mxu0 0.0
      %327 = vmatmul.mubr.f32.gmra.mrb[0].mxu0 %v253
      %v328 = vpop.f32.mrb[0].mxu0
      %v329 = vadd.f32 0.0, %v328
      %v330 = vpop.f32.mrb[0].mxu0
      %331 = vmatprep.mubr.f32.mxu0 0.0
      %332 = vmatmul.mubr.f32.gmra.mrb[0].mxu0 %v256
      %v333 = vpop.f32.mrb[0].mxu0
      %v334 = vadd.f32 0.0, %v333
      %v335 = vpop.f32.mrb[0].mxu0
      %336 = vdwg.mxu0
      %v338 = vsel %vm251, %v242, 0
      %v341 = vsel %vm251, %v243, 0
      %v344 = vsel %vm258, %v244, 0
      %346 = vmatprep.subr.mxu0 0.0
      %347 = vmatpush1.msra.mxu0 %v344
      %348 = vmatprep.subr.mxu0 0.0
      %349 = vmatpush1.msra.mxu0 0.0
      %350 = vmatprep.subr.mxu0 0.0
      %351 = vmatpush1.msra.mxu0 0.0
      %352 = vmatprep.subr.mxu0 0.0
      %353 = vmatpush1.msra.mxu0 0.0
      %354 = vmatprep.subr.mxu0 0.0
      %355 = vmatpush1.msra.mxu0 0.0
      %356 = vmatprep.subr.mxu0 0.0
      %357 = vmatpush1.msra.mxu0 0.0
      %358 = vmatprep.subr.mxu0 0.0
      %359 = vmatpush1.msra.mxu0 0.0
      %360 = vmatprep.subr.mxu0 0.0
      %361 = vmatpush1.msra.mxu0 0.0
      %362 = vmatprep.subr.mxu0 0.0
      %363 = vmatpush1.msra.mxu0 0.0
      %364 = vmatprep.subr.mxu0 0.0
      %365 = vmatpush1.msra.mxu0 0.0
      %366 = vmatprep.subr.mxu0 0.0
      %367 = vmatpush1.msra.mxu0 0.0
      %368 = vmatprep.subr.mxu0 0.0
      %369 = vmatpush1.msra.mxu0 0.0
      %370 = vmatprep.subr.mxu0 0.0
      %371 = vmatpush1.msra.mxu0 0.0
      %372 = vmatprep.subr.mxu0 0.0
      %373 = vmatpush1.msra.mxu0 0.0
      %374 = vmatprep.subr.mxu0 0.0
      %375 = vmatpush1.msra.mxu0 0.0
      %376 = vmatprep.subr.mxu0 0.0
      %377 = vmatpush1.msra.mxu0 0.0
      %378 = vmatprep.subr.mxu0 0.0
      %379 = vmatpush1.msra.mxu0 0.0
      %380 = vmatprep.subr.mxu0 0.0
      %381 = vmatpush1.msra.mxu0 0.0
      %382 = vmatprep.subr.mxu0 0.0
      %383 = vmatpush1.msra.mxu0 0.0
      %384 = vmatprep.subr.mxu0 0.0
      %385 = vmatpush1.msra.mxu0 0.0
      %386 = vmatprep.subr.mxu0 0.0
      %387 = vmatpush1.msra.mxu0 0.0
      %388 = vmatprep.subr.mxu0 0.0
      %389 = vmatpush1.msra.mxu0 0.0
      %390 = vmatprep.subr.mxu0 0.0
      %391 = vmatpush1.msra.mxu0 0.0
      %392 = vmatprep.subr.mxu0 0.0
      %393 = vmatpush1.msra.mxu0 0.0
      %394 = vmatprep.subr.mxu0 0.0
      %395 = vmatpush1.msra.mxu0 0.0
      %396 = vmatprep.subr.mxu0 0.0
      %397 = vmatpush1.msra.mxu0 0.0
      %398 = vmatprep.subr.mxu0 0.0
      %399 = vmatpush1.msra.mxu0 0.0
      %400 = vmatprep.subr.mxu0 0.0
      %401 = vmatpush1.msra.mxu0 0.0
      %402 = vmatprep.subr.mxu0 0.0
      %403 = vmatpush1.msra.mxu0 0.0
      %404 = vmatprep.subr.mxu0 0.0
      %405 = vmatpush1.msra.mxu0 0.0
      %406 = vmatprep.subr.mxu0 0.0
      %407 = vmatpush1.msra.mxu0 0.0
      %408 = vmatprep.subr.mxu0 0.0
      %409 = vmatpush1.msra.mxu0 0.0
      %410 = vmatprep.mubr.f32.mxu0 0.0
      %411 = vmatmul.mubr.f32.gmra.mrb[0].mxu0 %v338
      %v412 = vpop.f32.mrb[0].mxu0
      %v413 = vadd.f32 %v329, %v412
      %v414 = vpop.f32.mrb[0].mxu0
      %415 = vmatprep.mubr.f32.mxu0 0.0
      %416 = vmatmul.mubr.f32.gmra.mrb[0].mxu0 %v341
      %v417 = vpop.f32.mrb[0].mxu0
      %v418 = vadd.f32 %v334, %v417
      %v419 = vpop.f32.mrb[0].mxu0
      %420 = vdwg.mxu0
      %s421 = sadd.s32 %s240, 2
      %s422 = scalar_lea.vmem %s219, %s421
      %v423 = vld [vmem:[%s422] sm:$0xff]
      %v424 = vld [vmem:[%s422 + $0x8] sm:$0xff]
      %s425 = scalar_lea.vmem %s223, 8
      %v426 = vld [vmem:[%s425] sm:$0xf]
      %v428 = vsel %vm251, %v423, 0
      %v431 = vsel %vm251, %v424, 0
      %v434 = vsel %vm258, %v426, 0
      %436 = vmatprep.subr.mxu0 0.0
      %437 = vmatpush1.msra.mxu0 %v434
      %438 = vmatprep.subr.mxu0 0.0
      %439 = vmatpush1.msra.mxu0 0.0
      %440 = vmatprep.subr.mxu0 0.0
      %441 = vmatpush1.msra.mxu0 0.0
      %442 = vmatprep.subr.mxu0 0.0
      %443 = vmatpush1.msra.mxu0 0.0
      %444 = vmatprep.subr.mxu0 0.0
      %445 = vmatpush1.msra.mxu0 0.0
      %446 = vmatprep.subr.mxu0 0.0
      %447 = vmatpush1.msra.mxu0 0.0
      %448 = vmatprep.subr.mxu0 0.0
      %449 = vmatpush1.msra.mxu0 0.0
      %450 = vmatprep.subr.mxu0 0.0
      %451 = vmatpush1.msra.mxu0 0.0
      %452 = vmatprep.subr.mxu0 0.0
      %453 = vmatpush1.msra.mxu0 0.0
      %454 = vmatprep.subr.mxu0 0.0
      %455 = vmatpush1.msra.mxu0 0.0
      %456 = vmatprep.subr.mxu0 0.0
      %457 = vmatpush1.msra.mxu0 0.0
      %458 = vmatprep.subr.mxu0 0.0
      %459 = vmatpush1.msra.mxu0 0.0
      %460 = vmatprep.subr.mxu0 0.0
      %461 = vmatpush1.msra.mxu0 0.0
      %462 = vmatprep.subr.mxu0 0.0
      %463 = vmatpush1.msra.mxu0 0.0
      %464 = vmatprep.subr.mxu0 0.0
      %465 = vmatpush1.msra.mxu0 0.0
      %466 = vmatprep.subr.mxu0 0.0
      %467 = vmatpush1.msra.mxu0 0.0
      %468 = vmatprep.subr.mxu0 0.0
      %469 = vmatpush1.msra.mxu0 0.0
      %470 = vmatprep.subr.mxu0 0.0
      %471 = vmatpush1.msra.mxu0 0.0
      %472 = vmatprep.subr.mxu0 0.0
      %473 = vmatpush1.msra.mxu0 0.0
      %474 = vmatprep.subr.mxu0 0.0
      %475 = vmatpush1.msra.mxu0 0.0
      %476 = vmatprep.subr.mxu0 0.0
      %477 = vmatpush1.msra.mxu0 0.0
      %478 = vmatprep.subr.mxu0 0.0
      %479 = vmatpush1.msra.mxu0 0.0
      %480 = vmatprep.subr.mxu0 0.0
      %481 = vmatpush1.msra.mxu0 0.0
      %482 = vmatprep.subr.mxu0 0.0
      %483 = vmatpush1.msra.mxu0 0.0
      %484 = vmatprep.subr.mxu0 0.0
      %485 = vmatpush1.msra.mxu0 0.0
      %486 = vmatprep.subr.mxu0 0.0
      %487 = vmatpush1.msra.mxu0 0.0
      %488 = vmatprep.subr.mxu0 0.0
      %489 = vmatpush1.msra.mxu0 0.0
      %490 = vmatprep.subr.mxu0 0.0
      %491 = vmatpush1.msra.mxu0 0.0
      %492 = vmatprep.subr.mxu0 0.0
      %493 = vmatpush1.msra.mxu0 0.0
      %494 = vmatprep.subr.mxu0 0.0
      %495 = vmatpush1.msra.mxu0 0.0
      %496 = vmatprep.subr.mxu0 0.0
      %497 = vmatpush1.msra.mxu0 0.0
      %498 = vmatprep.subr.mxu0 0.0
      %499 = vmatpush1.msra.mxu0 0.0
      %500 = vmatprep.mubr.f32.mxu0 0.0
      %501 = vmatmul.mubr.f32.gmra.mrb[0].mxu0 %v428
      %v502 = vpop.f32.mrb[0].mxu0
      %v503 = vadd.f32 0.0, %v502
      %v504 = vpop.f32.mrb[0].mxu0
      %505 = vmatprep.mubr.f32.mxu0 0.0
      %506 = vmatmul.mubr.f32.gmra.mrb[0].mxu0 %v431
      %v507 = vpop.f32.mrb[0].mxu0
      %v508 = vadd.f32 0.0, %v507
      %v509 = vpop.f32.mrb[0].mxu0
      %510 = vdwg.mxu0
      %v511 = vadd.f32 %v413, %v503
      %v512 = vadd.f32 %v418, %v508
      %v513 = vld [vmem:[%s226] sm:$0x1]
      %v515 = vlaneseq
      %v516 = vshrl.u32 %v515, 7
      %v517 = vsub.s32 0, %v516
      %v518 = vrot.slane %v513, %v517
      %v520 = vadd.f32 %v511, %v518
      %v521 = vadd.f32 %v512, %v518
      %v522 = vmax.f32 %v520, 0.0
      %v523 = vmax.f32 %v521, 0.0
      %524 = vst [vmem:[%s238] sm:$0xff] %v522
      %525 = vst [vmem:[%s238 + $0x8] sm:$0xff] %v523
      %s526 = smul.u32 2, %s21
      %p527 = scmp.lt.s32.totalorder %s19, 1
      %s528 = scalar_select %p527, %s19, 1
      %p529 = scmp.lt.s32.totalorder %s526, 1
      %s530 = scalar_select %p529, %s526, 1
      %p531 = scmp.lt.s32.totalorder %s20, 0
      %s532 = scalar_select %p531, %s20, 0
      %s533 = sadd.s32 %s532, %s530
      %s534 = smul.addr %s528, 2
      %s535 = sadd.s32 %s533, %s534
      %s536 = smul.addr %s535, 8
      %s537 = scalar_lea.vmem %s3, %s536
      // Predicated region
      $region33: #{conv1d_relu.1} parent=31 // pred_check
        %p538 = pneg %p133
      $region34: #{conv1d_relu.1} parent=31 // pred_check_branch
        %540 = sbr.rel (%p538) target = $region36
      $region35: #{conv1d_relu.1} parent=31 // pred_region
        %s541 = smul.u32 2, %s21
      $region36: #{conv1d_relu.1} parent=31 // pred_fallthru
        _
    $region32: #{conv1d_relu.1} parent=5 // pred_fallthru
      _
    %p542 = scmp.le.s32.totalorder 2, %s9
    // Predicated region
    $region37: #{conv1d_relu.1} parent=5 // pred_check
      %p543 = pneg %p542
    $region38: #{conv1d_relu.1} parent=5 // pred_check_branch
      %545 = sbr.rel (%p543) target = $region40
    $region39: #{conv1d_relu.1} parent=5 // pred_region
      %s546 = ssub.s32 %s9, 2
      // Predicated region
      $region41: #{conv1d_relu.1} parent=39 // pred_check
        %p547 = pneg %p139
      $region42: #{conv1d_relu.1} parent=39 // pred_check_branch
        %549 = sbr.rel (%p547) target = $region44
      $region43: #{conv1d_relu.1} parent=39 // pred_region
        %s550 = smul.u32 2, %s24
        %p551 = scmp.lt.s32.totalorder %s22, 1
        %s552 = scalar_select %p551, %s22, 1
        %p553 = scmp.lt.s32.totalorder %s550, 1
        %s554 = scalar_select %p553, %s550, 1
        %p555 = scmp.lt.s32.totalorder %s23, 0
        %s556 = scalar_select %p555, %s23, 0
        %s557 = sadd.s32 %s556, %s554
        %s558 = smul.addr %s552, 2
        %s559 = sadd.s32 %s557, %s558
        %s560 = smul.addr %s559, 8
        %s561 = scalar_lea.vmem %s3, %s560
      $region44: #{conv1d_relu.1} parent=39 // pred_fallthru
        _
    $region40: #{conv1d_relu.1} parent=5 // pred_fallthru
      _
  $region6: #{conv1d_relu.1} parent=0 // loop_footer
    %s13 = sadd.s32 1, %s9
  $region7: #{conv1d_relu.1} parent=0 // loop_footer_branch
    %8 = sbr.rel target = $region3
  $region8: #{conv1d_relu.1} parent=0 // loop_exit
    _

</llo_original>
